<compile_context>
chip_gen: v6e
topology: v6e:2x2x1
jax: 0.10.0
libtpu: 0.0.40
codegen_flags: <defaults>
</compile_context>

<pallas_src>
import functools

import jax
import jax.numpy as jnp
from jax import lax
from jax.experimental import pallas as pl
from jax.experimental.pallas import tpu as pltpu

IN_CHANNELS_L = 2   # inp // 2 for inp = 4


# ----------------------------- fused Pallas kernel --------------------------

def _inverted_residual_kernel(x_ref, p1_ref, p2_ref, o_ref, pad_ref,
                              *, h, w, c_left, hidden, c_out):
    s = h * w
    halo = w + 1                                   # max |flattened tap offset|

    x = x_ref[0].astype(jnp.float32)               # (C, S): chans on sublanes
    x2 = x[c_left:, :]                             # (c_right, S) right split
    c_right = x2.shape[0]

    # packed param columns:
    #   p1 = [ w1 (c_right) | b1 | dw (9 taps) | bd ]   shape (hidden, c_right+11)
    #   p2 = [ w2 (hidden)  | b2 ]                      shape (c_out, hidden+1)
    W1 = 0
    B1 = c_right
    DW = c_right + 1
    BD = c_right + 10
    W2 = 0
    B2 = hidden

    # ---- 1x1 expand (BN-scale folded) + bias + ReLU : VPU broadcast FMAs ----
    hid = p1_ref[:, W1:W1 + 1] * x2[0:1, :]        # (hidden,1)*(1,S) -> (hidden,S)
    for ci in range(1, c_right):
        hid = hid + p1_ref[:, W1 + ci:W1 + ci + 1] * x2[ci:ci + 1, :]
    hid = jnp.maximum(hid + p1_ref[:, B1:B1 + 1], 0.0)

    # ---- depthwise 3x3 (stride 1, pad 1, BN-scale folded) + bias + ReLU -----
    # Zero-bordered copy of hid in VMEM; each tap is a static lane-offset
    # window load.  The zero halo already handles every row-boundary (dy)
    # violation; only the column wrap-around (dx != 0) needs masking, and the
    # mask is shared by all three dy taps of a dx group.
    pad_ref[...] = jnp.zeros_like(pad_ref)
    pad_ref[:, pl.ds(halo, s)] = hid

    lane = lax.broadcasted_iota(jnp.int32, (1, s), 1)
    if (w & (w - 1)) == 0:                         # power-of-two width (demo)
        xi = lane & (w - 1)
    else:
        xi = lane % w

    acc = p1_ref[:, BD:BD + 1]                     # start from the dw bias
    for dx in (-1, 0, 1):
        col = None
        for dy in (-1, 0, 1):
            t = (dy + 1) * 3 + (dx + 1)
            d = dy * w + dx
            tap = hid if d == 0 else pad_ref[:, pl.ds(halo + d, s)]
            term = p1_ref[:, DW + t:DW + t + 1] * tap
            col = term if col is None else col + term
        if dx == -1:
            col = jnp.where(xi > 0, col, 0.0)
        elif dx == 1:
            col = jnp.where(xi < w - 1, col, 0.0)
        acc = acc + col
    g = jnp.maximum(acc, 0.0)

    # ---- 1x1 project (BN-scale folded) + bias + residual (identity shortcut)
    out2 = p2_ref[:, W2:W2 + 1] * g[0:1, :]
    for hi in range(1, hidden):
        out2 = out2 + p2_ref[:, W2 + hi:W2 + hi + 1] * g[hi:hi + 1, :]
    out2 = out2 + p2_ref[:, B2:B2 + 1] + x2

    # ---- concat([x1, out2]) + channel shuffle (groups=2) fused into store ---
    c_total = c_left + c_out
    cpg = c_total // 2
    cat = [x[j:j + 1, :] for j in range(c_left)] + \
          [out2[j:j + 1, :] for j in range(c_out)]
    shuffled = [cat[(i % 2) * cpg + i // 2] for i in range(c_total)]
    o_ref[0] = jnp.concatenate(shuffled, axis=0).astype(o_ref.dtype)


# ----------------------------- wrapper ---------------------------------------

def inverted_residual_pallas(x_nchw, p, *, in_channels_l=IN_CHANNELS_L):
    n, c, hh, ww = x_nchw.shape
    s = hh * ww
    c_left = in_channels_l
    c_right = c - c_left
    hidden = p["dw_w"].shape[-1]
    c_out = p["pw2_w"].shape[-1]
    halo = ww + 1

    # free reshape (collapse trailing dims) -- NCHW is already lane-dense here
    x3 = x_nchw.reshape(n, c, s)

    # Fold BN scales into the conv weights (inference-mode BN) and pack the
    # tiny per-layer params into two kernel-friendly tiles.
    f32 = jnp.float32
    w1f = (p["pw1_w"].astype(f32) * p["pw1_scale"].astype(f32)[None, :]).T   # (hidden, c_right)
    b1 = p["pw1_bias"].astype(f32).reshape(hidden, 1)
    dwf = (p["dw_w"].astype(f32).reshape(9, hidden)
           * p["dw_scale"].astype(f32)[None, :]).T                           # (hidden, 9) tap-minor
    bd = p["dw_bias"].astype(f32).reshape(hidden, 1)
    w2f = (p["pw2_w"].astype(f32) * p["pw2_scale"].astype(f32)[None, :]).T   # (c_out, hidden)
    b2 = p["pw2_bias"].astype(f32).reshape(c_out, 1)

    p1 = jnp.concatenate([w1f, b1, dwf, bd], axis=1)      # (hidden, c_right + 11)
    p2 = jnp.concatenate([w2f, b2], axis=1)               # (c_out, hidden + 1)

    kern = functools.partial(_inverted_residual_kernel,
                             h=hh, w=ww, c_left=c_left,
                             hidden=hidden, c_out=c_out)
    const = lambda i: (0, 0)
    out = pl.pallas_call(
        kern,
        out_shape=jax.ShapeDtypeStruct((n, c_left + c_out, s), x_nchw.dtype),
        grid=(n,),
        in_specs=[
            pl.BlockSpec((1, c, s), lambda i: (i, 0, 0)),   # x (per image)
            pl.BlockSpec(p1.shape, const),                  # packed params #1
            pl.BlockSpec(p2.shape, const),                  # packed params #2
        ],
        out_specs=pl.BlockSpec((1, c_left + c_out, s), lambda i: (i, 0, 0)),
        scratch_shapes=[pltpu.VMEM((hidden, s + 2 * halo), jnp.float32)],
        compiler_params=pltpu.CompilerParams(
            dimension_semantics=("parallel",)),
    )(x3, p1, p2)
    return out.reshape(n, c_left + c_out, hh, ww)


# ------------------------ pure-JAX reference ---------------------------------

def shuffle_channels(x_nchw, groups=2):
    n, c, h, w = x_nchw.shape
    x = x_nchw.reshape(n, groups, c // groups, h, w)
    x = jnp.transpose(x, (0, 2, 1, 3, 4))
    return x.reshape(n, c, h, w)


def inverted_residual_ref(x_nchw, p):
    dn = ("NHWC", "HWIO", "NHWC")
    x1 = x_nchw[:, :IN_CHANNELS_L]
    x2 = jnp.transpose(x_nchw[:, IN_CHANNELS_L:], (0, 2, 3, 1))

    h = lax.conv_general_dilated(x2, p["pw1_w"].reshape(1, 1, 2, 4),
                                 (1, 1), "VALID", dimension_numbers=dn)
    h = jnp.maximum(h * p["pw1_scale"] + p["pw1_bias"], 0.0)
    h = lax.conv_general_dilated(h, p["dw_w"].reshape(3, 3, 1, 4),
                                 (1, 1), ((1, 1), (1, 1)),
                                 dimension_numbers=dn, feature_group_count=4)
    h = jnp.maximum(h * p["dw_scale"] + p["dw_bias"], 0.0)
    h = lax.conv_general_dilated(h, p["pw2_w"].reshape(1, 1, 4, 2),
                                 (1, 1), "VALID", dimension_numbers=dn)
    h = h * p["pw2_scale"] + p["pw2_bias"] + x2

    out2 = jnp.transpose(h, (0, 3, 1, 2))
    out = jnp.concatenate([x1, out2], axis=1)
    return shuffle_channels(out, groups=2)


# ------------------------ deterministic params --------------------------------

def _fold_bn(gamma, beta, mean, var, eps=1e-5):
    scale = gamma / jnp.sqrt(var + eps)
    return scale, beta - mean * scale


def init_params(key):
    ks = jax.random.split(key, 16)

    def bn(c, k0, k1, k2, k3):
        gamma = 1.0 + 0.1 * jax.random.normal(k0, (c,), jnp.float32)
        beta = 0.1 * jax.random.normal(k1, (c,), jnp.float32)
        mean = 0.1 * jax.random.normal(k2, (c,), jnp.float32)
        var = 0.5 + jax.random.uniform(k3, (c,), jnp.float32)
        return _fold_bn(gamma, beta, mean, var)

    p = {}
    p["pw1_w"] = 0.3 * jax.random.normal(ks[0], (2, 4), jnp.float32)   # Cin,Cout
    p["pw1_scale"], p["pw1_bias"] = bn(4, ks[1], ks[2], ks[3], ks[4])
    p["dw_w"] = 0.3 * jax.random.normal(ks[5], (3, 3, 4), jnp.float32)  # kh,kw,C
    p["dw_scale"], p["dw_bias"] = bn(4, ks[6], ks[7], ks[8], ks[9])
    p["pw2_w"] = 0.3 * jax.random.normal(ks[10], (4, 2), jnp.float32)
    p["pw2_scale"], p["pw2_bias"] = bn(2, ks[11], ks[12], ks[13], ks[14])
    return p


# --------------------------------- main ---------------------------------------

if __name__ == "__main__":
    key = jax.random.PRNGKey(0)
    kx, kp = jax.random.split(key)
    x = jax.random.normal(kx, (2, 4, 16, 16), jnp.float32)   # NCHW like PyTorch
    params = init_params(kp)

    out = jax.block_until_ready(jax.jit(inverted_residual_pallas)(x, params))
    ref = jax.block_until_ready(jax.jit(inverted_residual_ref)(x, params))

    assert out.shape == (2, 4, 16, 16), out.shape
    max_err = float(jnp.max(jnp.abs(out - ref)))
    assert jnp.allclose(out, ref, rtol=1e-4, atol=1e-4), max_err
    print("KERNEL_OK")
</pallas_src>

<mosaic_0001>
module attributes {stable_mosaic.version = 11 : i64} {
  func.func @_inverted_residual_kernel(%arg0: i32, %arg1: memref<1x4x256xf32, #tpu.memory_space<vmem>>, %arg2: memref<4x13xf32, #tpu.memory_space<vmem>>, %arg3: memref<2x5xf32, #tpu.memory_space<vmem>>, %arg4: memref<1x4x256xf32, #tpu.memory_space<vmem>>, %arg5: memref<4x290xf32, #tpu.memory_space<vmem>>) attributes {dimension_semantics = [#tpu.dimension_semantics<parallel>], iteration_bounds = array<i64: 2>, scalar_prefetch = 0 : i64, scratch_operands = 1 : i64, tpu.core_type = #tpu.core_type<tc>, window_params = [{transform_indices = @transform_0, window_bounds = array<i64: 1, 4, 256>}, {pipeline_mode = #tpu.pipeline_mode<synchronous>, transform_indices = @transform_1, window_bounds = array<i64: 4, 13>}, {pipeline_mode = #tpu.pipeline_mode<synchronous>, transform_indices = @transform_2, window_bounds = array<i64: 2, 5>}, {transform_indices = @transform_3, window_bounds = array<i64: 1, 4, 256>}]} {
    %c0 = arith.constant 0 : index
    %c0_0 = arith.constant 0 : index
    %c0_1 = arith.constant 0 : index
    %0 = vector.load %arg1[%c0, %c0_0, %c0_1] : memref<1x4x256xf32, #tpu.memory_space<vmem>>, vector<1x4x256xf32>
    %1 = vector.shape_cast %0 : vector<1x4x256xf32> to vector<4x256xf32>
    %2 = vector.extract_strided_slice %1 {offsets = [2, 0], sizes = [2, 256], strides = [1, 1]} : vector<4x256xf32> to vector<2x256xf32>
    %c0_2 = arith.constant 0 : index
    %c0_3 = arith.constant 0 : index
    %3 = vector.load %arg2[%c0_2, %c0_3] : memref<4x13xf32, #tpu.memory_space<vmem>>, vector<4x1xf32>
    %4 = vector.extract_strided_slice %2 {offsets = [0, 0], sizes = [1, 256], strides = [1, 1]} : vector<2x256xf32> to vector<1x256xf32>
    %5 = vector.broadcast %3 : vector<4x1xf32> to vector<4x256xf32>
    %6 = vector.broadcast %4 : vector<1x256xf32> to vector<4x256xf32>
    %7 = arith.mulf %5, %6 : vector<4x256xf32>
    %c0_4 = arith.constant 0 : index
    %c1 = arith.constant 1 : index
    %8 = vector.load %arg2[%c0_4, %c1] : memref<4x13xf32, #tpu.memory_space<vmem>>, vector<4x1xf32>
    %9 = vector.extract_strided_slice %2 {offsets = [1, 0], sizes = [1, 256], strides = [1, 1]} : vector<2x256xf32> to vector<1x256xf32>
    %10 = vector.broadcast %8 : vector<4x1xf32> to vector<4x256xf32>
    %11 = vector.broadcast %9 : vector<1x256xf32> to vector<4x256xf32>
    %12 = arith.mulf %10, %11 : vector<4x256xf32>
    %13 = arith.addf %7, %12 : vector<4x256xf32>
    %c0_5 = arith.constant 0 : index
    %c2 = arith.constant 2 : index
    %14 = vector.load %arg2[%c0_5, %c2] : memref<4x13xf32, #tpu.memory_space<vmem>>, vector<4x1xf32>
    %15 = vector.broadcast %14 : vector<4x1xf32> to vector<4x256xf32>
    %16 = arith.addf %13, %15 : vector<4x256xf32>
    %cst = arith.constant 0.000000e+00 : f32
    %17 = vector.broadcast %cst : f32 to vector<4x256xf32>
    %18 = arith.maximumf %16, %17 : vector<4x256xf32>
    %cst_6 = arith.constant 0.000000e+00 : f32
    %19 = vector.broadcast %cst_6 : f32 to vector<4x290xf32>
    %c0_7 = arith.constant 0 : index
    %c0_8 = arith.constant 0 : index
    %20 = vector.load %arg5[%c0_7, %c0_8] : memref<4x290xf32, #tpu.memory_space<vmem>>, vector<4x290xf32>
    tpu.vector_store %arg5[%c0_7, %c0_8], %19 {strides = array<i32>} : memref<4x290xf32, #tpu.memory_space<vmem>>, vector<4x290xf32>,
    %c0_9 = arith.constant 0 : index
    %c17 = arith.constant 17 : index
    %21 = vector.load %arg5[%c0_9, %c17] : memref<4x290xf32, #tpu.memory_space<vmem>>, vector<4x256xf32>
    tpu.vector_store %arg5[%c0_9, %c17], %18 {strides = array<i32>} : memref<4x290xf32, #tpu.memory_space<vmem>>, vector<4x256xf32>,
    %22 = tpu.iota {dimensions = array<i32: 1>} : vector<1x256xi32>
    %c15_i32 = arith.constant 15 : i32
    %23 = vector.broadcast %c15_i32 : i32 to vector<1x256xi32>
    %24 = arith.andi %22, %23 : vector<1x256xi32>
    %c0_10 = arith.constant 0 : index
    %c12 = arith.constant 12 : index
    %25 = vector.load %arg2[%c0_10, %c12] : memref<4x13xf32, #tpu.memory_space<vmem>>, vector<4x1xf32>
    %c0_11 = arith.constant 0 : index
    %c0_12 = arith.constant 0 : index
    %26 = vector.load %arg5[%c0_11, %c0_12] : memref<4x290xf32, #tpu.memory_space<vmem>>, vector<4x256xf32>
    %c0_13 = arith.constant 0 : index
    %c3 = arith.constant 3 : index
    %27 = vector.load %arg2[%c0_13, %c3] : memref<4x13xf32, #tpu.memory_space<vmem>>, vector<4x1xf32>
    %28 = vector.broadcast %27 : vector<4x1xf32> to vector<4x256xf32>
    %29 = arith.mulf %28, %26 : vector<4x256xf32>
    %c0_14 = arith.constant 0 : index
    %c16 = arith.constant 16 : index
    %30 = vector.load %arg5[%c0_14, %c16] : memref<4x290xf32, #tpu.memory_space<vmem>>, vector<4x256xf32>
    %c0_15 = arith.constant 0 : index
    %c6 = arith.constant 6 : index
    %31 = vector.load %arg2[%c0_15, %c6] : memref<4x13xf32, #tpu.memory_space<vmem>>, vector<4x1xf32>
    %32 = vector.broadcast %31 : vector<4x1xf32> to vector<4x256xf32>
    %33 = arith.mulf %32, %30 : vector<4x256xf32>
    %34 = arith.addf %29, %33 : vector<4x256xf32>
    %c0_16 = arith.constant 0 : index
    %c32 = arith.constant 32 : index
    %35 = vector.load %arg5[%c0_16, %c32] : memref<4x290xf32, #tpu.memory_space<vmem>>, vector<4x256xf32>
    %c0_17 = arith.constant 0 : index
    %c9 = arith.constant 9 : index
    %36 = vector.load %arg2[%c0_17, %c9] : memref<4x13xf32, #tpu.memory_space<vmem>>, vector<4x1xf32>
    %37 = vector.broadcast %36 : vector<4x1xf32> to vector<4x256xf32>
    %38 = arith.mulf %37, %35 : vector<4x256xf32>
    %39 = arith.addf %34, %38 : vector<4x256xf32>
    %c0_i32 = arith.constant 0 : i32
    %40 = vector.broadcast %c0_i32 : i32 to vector<1x256xi32>
    %41 = arith.cmpi sgt, %24, %40 : vector<1x256xi32>
    %cst_18 = arith.constant 0.000000e+00 : f32
    %42 = vector.shape_cast %41 : vector<1x256xi1> to vector<1x256xi1>
    %43 = vector.broadcast %42 : vector<1x256xi1> to vector<4x256xi1>
    %44 = vector.broadcast %cst_18 : f32 to vector<4x256xf32>
    %45 = arith.select %43, %39, %44 : vector<4x256xi1>, vector<4x256xf32>
    %46 = vector.broadcast %25 : vector<4x1xf32> to vector<4x256xf32>
    %47 = arith.addf %46, %45 : vector<4x256xf32>
    %c0_19 = arith.constant 0 : index
    %c1_20 = arith.constant 1 : index
    %48 = vector.load %arg5[%c0_19, %c1_20] : memref<4x290xf32, #tpu.memory_space<vmem>>, vector<4x256xf32>
    %c0_21 = arith.constant 0 : index
    %c4 = arith.constant 4 : index
    %49 = vector.load %arg2[%c0_21, %c4] : memref<4x13xf32, #tpu.memory_space<vmem>>, vector<4x1xf32>
    %50 = vector.broadcast %49 : vector<4x1xf32> to vector<4x256xf32>
    %51 = arith.mulf %50, %48 : vector<4x256xf32>
    %c0_22 = arith.constant 0 : index
    %c7 = arith.constant 7 : index
    %52 = vector.load %arg2[%c0_22, %c7] : memref<4x13xf32, #tpu.memory_space<vmem>>, vector<4x1xf32>
    %53 = vector.broadcast %52 : vector<4x1xf32> to vector<4x256xf32>
    %54 = arith.mulf %53, %18 : vector<4x256xf32>
    %55 = arith.addf %51, %54 : vector<4x256xf32>
    %c0_23 = arith.constant 0 : index
    %c33 = arith.constant 33 : index
    %56 = vector.load %arg5[%c0_23, %c33] : memref<4x290xf32, #tpu.memory_space<vmem>>, vector<4x256xf32>
    %c0_24 = arith.constant 0 : index
    %c10 = arith.constant 10 : index
    %57 = vector.load %arg2[%c0_24, %c10] : memref<4x13xf32, #tpu.memory_space<vmem>>, vector<4x1xf32>
    %58 = vector.broadcast %57 : vector<4x1xf32> to vector<4x256xf32>
    %59 = arith.mulf %58, %56 : vector<4x256xf32>
    %60 = arith.addf %55, %59 : vector<4x256xf32>
    %61 = arith.addf %47, %60 : vector<4x256xf32>
    %c0_25 = arith.constant 0 : index
    %c2_26 = arith.constant 2 : index
    %62 = vector.load %arg5[%c0_25, %c2_26] : memref<4x290xf32, #tpu.memory_space<vmem>>, vector<4x256xf32>
    %c0_27 = arith.constant 0 : index
    %c5 = arith.constant 5 : index
    %63 = vector.load %arg2[%c0_27, %c5] : memref<4x13xf32, #tpu.memory_space<vmem>>, vector<4x1xf32>
    %64 = vector.broadcast %63 : vector<4x1xf32> to vector<4x256xf32>
    %65 = arith.mulf %64, %62 : vector<4x256xf32>
    %c0_28 = arith.constant 0 : index
    %c18 = arith.constant 18 : index
    %66 = vector.load %arg5[%c0_28, %c18] : memref<4x290xf32, #tpu.memory_space<vmem>>, vector<4x256xf32>
    %c0_29 = arith.constant 0 : index
    %c8 = arith.constant 8 : index
    %67 = vector.load %arg2[%c0_29, %c8] : memref<4x13xf32, #tpu.memory_space<vmem>>, vector<4x1xf32>
    %68 = vector.broadcast %67 : vector<4x1xf32> to vector<4x256xf32>
    %69 = arith.mulf %68, %66 : vector<4x256xf32>
    %70 = arith.addf %65, %69 : vector<4x256xf32>
    %c0_30 = arith.constant 0 : index
    %c34 = arith.constant 34 : index
    %71 = vector.load %arg5[%c0_30, %c34] : memref<4x290xf32, #tpu.memory_space<vmem>>, vector<4x256xf32>
    %c0_31 = arith.constant 0 : index
    %c11 = arith.constant 11 : index
    %72 = vector.load %arg2[%c0_31, %c11] : memref<4x13xf32, #tpu.memory_space<vmem>>, vector<4x1xf32>
    %73 = vector.broadcast %72 : vector<4x1xf32> to vector<4x256xf32>
    %74 = arith.mulf %73, %71 : vector<4x256xf32>
    %75 = arith.addf %70, %74 : vector<4x256xf32>
    %c15_i32_32 = arith.constant 15 : i32
    %76 = vector.broadcast %c15_i32_32 : i32 to vector<1x256xi32>
    %77 = arith.cmpi slt, %24, %76 : vector<1x256xi32>
    %cst_33 = arith.constant 0.000000e+00 : f32
    %78 = vector.shape_cast %77 : vector<1x256xi1> to vector<1x256xi1>
    %79 = vector.broadcast %78 : vector<1x256xi1> to vector<4x256xi1>
    %80 = vector.broadcast %cst_33 : f32 to vector<4x256xf32>
    %81 = arith.select %79, %75, %80 : vector<4x256xi1>, vector<4x256xf32>
    %82 = arith.addf %61, %81 : vector<4x256xf32>
    %cst_34 = arith.constant 0.000000e+00 : f32
    %83 = vector.broadcast %cst_34 : f32 to vector<4x256xf32>
    %84 = arith.maximumf %82, %83 : vector<4x256xf32>
    %c0_35 = arith.constant 0 : index
    %c0_36 = arith.constant 0 : index
    %85 = vector.load %arg3[%c0_35, %c0_36] : memref<2x5xf32, #tpu.memory_space<vmem>>, vector<2x1xf32>
    %86 = vector.extract_strided_slice %84 {offsets = [0, 0], sizes = [1, 256], strides = [1, 1]} : vector<4x256xf32> to vector<1x256xf32>
    %87 = vector.broadcast %85 : vector<2x1xf32> to vector<2x256xf32>
    %88 = vector.broadcast %86 : vector<1x256xf32> to vector<2x256xf32>
    %89 = arith.mulf %87, %88 : vector<2x256xf32>
    %c0_37 = arith.constant 0 : index
    %c1_38 = arith.constant 1 : index
    %90 = vector.load %arg3[%c0_37, %c1_38] : memref<2x5xf32, #tpu.memory_space<vmem>>, vector<2x1xf32>
    %91 = vector.extract_strided_slice %84 {offsets = [1, 0], sizes = [1, 256], strides = [1, 1]} : vector<4x256xf32> to vector<1x256xf32>
    %92 = vector.broadcast %90 : vector<2x1xf32> to vector<2x256xf32>
    %93 = vector.broadcast %91 : vector<1x256xf32> to vector<2x256xf32>
    %94 = arith.mulf %92, %93 : vector<2x256xf32>
    %95 = arith.addf %89, %94 : vector<2x256xf32>
    %c0_39 = arith.constant 0 : index
    %c2_40 = arith.constant 2 : index
    %96 = vector.load %arg3[%c0_39, %c2_40] : memref<2x5xf32, #tpu.memory_space<vmem>>, vector<2x1xf32>
    %97 = vector.extract_strided_slice %84 {offsets = [2, 0], sizes = [1, 256], strides = [1, 1]} : vector<4x256xf32> to vector<1x256xf32>
    %98 = vector.broadcast %96 : vector<2x1xf32> to vector<2x256xf32>
    %99 = vector.broadcast %97 : vector<1x256xf32> to vector<2x256xf32>
    %100 = arith.mulf %98, %99 : vector<2x256xf32>
    %101 = arith.addf %95, %100 : vector<2x256xf32>
    %c0_41 = arith.constant 0 : index
    %c3_42 = arith.constant 3 : index
    %102 = vector.load %arg3[%c0_41, %c3_42] : memref<2x5xf32, #tpu.memory_space<vmem>>, vector<2x1xf32>
    %103 = vector.extract_strided_slice %84 {offsets = [3, 0], sizes = [1, 256], strides = [1, 1]} : vector<4x256xf32> to vector<1x256xf32>
    %104 = vector.broadcast %102 : vector<2x1xf32> to vector<2x256xf32>
    %105 = vector.broadcast %103 : vector<1x256xf32> to vector<2x256xf32>
    %106 = arith.mulf %104, %105 : vector<2x256xf32>
    %107 = arith.addf %101, %106 : vector<2x256xf32>
    %c0_43 = arith.constant 0 : index
    %c4_44 = arith.constant 4 : index
    %108 = vector.load %arg3[%c0_43, %c4_44] : memref<2x5xf32, #tpu.memory_space<vmem>>, vector<2x1xf32>
    %109 = vector.broadcast %108 : vector<2x1xf32> to vector<2x256xf32>
    %110 = arith.addf %107, %109 : vector<2x256xf32>
    %111 = arith.addf %110, %2 : vector<2x256xf32>
    %112 = vector.extract_strided_slice %1 {offsets = [0, 0], sizes = [1, 256], strides = [1, 1]} : vector<4x256xf32> to vector<1x256xf32>
    %113 = vector.extract_strided_slice %1 {offsets = [1, 0], sizes = [1, 256], strides = [1, 1]} : vector<4x256xf32> to vector<1x256xf32>
    %114 = vector.extract_strided_slice %111 {offsets = [0, 0], sizes = [1, 256], strides = [1, 1]} : vector<2x256xf32> to vector<1x256xf32>
    %115 = vector.extract_strided_slice %111 {offsets = [1, 0], sizes = [1, 256], strides = [1, 1]} : vector<2x256xf32> to vector<1x256xf32>
    %116 = tpu.concatenate %112, %114, %113, %115 in 0 : vector<1x256xf32>, vector<1x256xf32>, vector<1x256xf32>, vector<1x256xf32> -> vector<4x256xf32>
    %c0_45 = arith.constant 0 : index
    %c0_46 = arith.constant 0 : index
    %c0_47 = arith.constant 0 : index
    %117 = vector.load %arg4[%c0_45, %c0_46, %c0_47] : memref<1x4x256xf32, #tpu.memory_space<vmem>>, vector<1x4x256xf32>
    %118 = vector.shape_cast %117 : vector<1x4x256xf32> to vector<4x256xf32>
    %119 = vector.shape_cast %116 : vector<4x256xf32> to vector<1x4x256xf32>
    tpu.vector_store %arg4[%c0_45, %c0_46, %c0_47], %119 {strides = array<i32>} : memref<1x4x256xf32, #tpu.memory_space<vmem>>, vector<1x4x256xf32>,
    return
  }
  func.func @transform_0(%arg0: i32) -> (i32, i32, i32) {
    %c0_i32 = arith.constant 0 : i32
    %c0_i32_0 = arith.constant 0 : i32
    %c0_i32_1 = arith.constant 0 : i32
    return %arg0, %c0_i32, %c0_i32_0 : i32, i32, i32
  }
  func.func @transform_1(%arg0: i32) -> (i32, i32) {
    %c0_i32 = arith.constant 0 : i32
    %c0_i32_0 = arith.constant 0 : i32
    %c0_i32_1 = arith.constant 0 : i32
    return %c0_i32, %c0_i32_0 : i32, i32
  }
  func.func @transform_2(%arg0: i32) -> (i32, i32) {
    %c0_i32 = arith.constant 0 : i32
    %c0_i32_0 = arith.constant 0 : i32
    %c0_i32_1 = arith.constant 0 : i32
    return %c0_i32, %c0_i32_0 : i32, i32
  }
  func.func @transform_3(%arg0: i32) -> (i32, i32, i32) {
    %c0_i32 = arith.constant 0 : i32
    %c0_i32_0 = arith.constant 0 : i32
    %c0_i32_1 = arith.constant 0 : i32
    return %arg0, %c0_i32, %c0_i32_0 : i32, i32, i32
  }
}

</mosaic_0001>

<llo_original>
// kernel: inverted_residual_pallas.1
$region0: #{inverted_residual_pallas.1}
  #allocation0 [shape = 'u32[]', space=smem, size = 0x4, offset = 0x4, fixed_abs, tag = 'smem constant byte address 0x4 - core index']
  #allocation1 [shape = 'u32[144,128]{1,0:T(1,128)}', space=vmem, size = 0x12000, scoped, tag = 'internal scratch']
  #allocation2 [shape = 'f32[4,290]{1,0:T(4,128)}', space=vmem, size = 0x1800, scoped, tag = 'scratch operand']
  %s0 = inlined_call_operand.vmem [shape: f32[2,4,256], index: 0, kind: input, shape index: {}]
  %s1 = inlined_call_operand.vmem [shape: f32[4,13], index: 1, kind: input, shape index: {}]
  %s2 = inlined_call_operand.vmem [shape: f32[2,5], index: 2, kind: input, shape index: {}]
  %s3 = inlined_call_operand.vmem [shape: f32[2,4,256], index: 3, kind: output, shape index: {}]
  %s4 = sld [smem:[#allocation0]]
  $region45: #{inverted_residual_pallas.1} parent=0
    _
  %s6 = ssub.s32 1, %s4
  %s7 = scalar_select 0, %s6, %s4
  loop: start=0, step=1, limit=4
  $region2: #{inverted_residual_pallas.1} parent=0 // loop_pre_header
    _
  $region3: #{inverted_residual_pallas.1} parent=0 // loop_header
    %s9 = sphi 0, %s13
    %p10 = scmp.ge.s32.totalorder %s9, 4
    %s19 = sphi 0, %s21
    %s22 = sphi 0, %s19
    %s23 = sphi 0, %s22
    %s39 = sphi 0, %s23
    %s43 = sphi 0, %s43
    %s45 = sphi 0, %s43
    %s46 = sphi 0, %s45
    %s60 = sphi 0, %s46
    %s64 = sphi 0, %s64
    %s66 = sphi 0, %s64
    %s67 = sphi 0, %s66
    %s81 = sphi 0, %s67
    %s87 = sphi 0, %s89
    %s90 = sphi 0, %s87
    %s91 = sphi 0, %s90
    %s107 = sphi 0, %s91
  $region4: #{inverted_residual_pallas.1} parent=0 // loop_header_branch
    %12 = sbr.rel (%p10) target = $region8
  $region5: #{inverted_residual_pallas.1} parent=0 // loop_body
    %s14 = ssub.s32 %s9, 1
    %s15 = ssub.s32 %s9, 2
    %s16 = sadd.s32 %s9, 1
    %s17 = ssub.s32 %s9, %s16
    %p18 = scmp.eq.s32.totalorder %s17, 0
    %s20 = sadd.s32 %s19, 1
    %s21 = scalar_select %p18, %s19, %s20
    %p24 = pneg %p18
    %p25 = scmp.eq.s32.totalorder %s9, 1
    %p26 = por %p24, %p25
    %p27 = scmp.ne.s32.totalorder %s19, %s22
    %p28 = scmp.eq.s32.totalorder %s9, 0
    %p29 = por %p27, %p28
    %p30 = scmp.ne.s32.totalorder %s19, %s22
    %p31 = scmp.eq.s32.totalorder %s14, 1
    %p32 = por %p30, %p31
    %p33 = scmp.ne.s32.totalorder %s22, %s23
    %p34 = scmp.eq.s32.totalorder %s14, 0
    %p35 = por %p33, %p34
    %p36 = scmp.ne.s32.totalorder %s22, %s23
    %p37 = scmp.eq.s32.totalorder %s15, 1
    %p38 = por %p36, %p37
    %p40 = scmp.ne.s32.totalorder %s23, %s39
    %p41 = scmp.eq.s32.totalorder %s15, 0
    %p42 = por %p40, %p41
    %s44 = sadd.s32 %s43, 1
    %p47 = scmp.eq.s32.totalorder %s9, 1
    %p48 = scmp.ne.s32.totalorder %s43, %s45
    %p49 = scmp.eq.s32.totalorder %s9, 0
    %p50 = por %p48, %p49
    %p51 = scmp.ne.s32.totalorder %s43, %s45
    %p52 = scmp.eq.s32.totalorder %s14, 1
    %p53 = por %p51, %p52
    %p54 = scmp.ne.s32.totalorder %s45, %s46
    %p55 = scmp.eq.s32.totalorder %s14, 0
    %p56 = por %p54, %p55
    %p57 = scmp.ne.s32.totalorder %s45, %s46
    %p58 = scmp.eq.s32.totalorder %s15, 1
    %p59 = por %p57, %p58
    %p61 = scmp.ne.s32.totalorder %s46, %s60
    %p62 = scmp.eq.s32.totalorder %s15, 0
    %p63 = por %p61, %p62
    %s65 = sadd.s32 %s64, 1
    %p68 = scmp.eq.s32.totalorder %s9, 1
    %p69 = scmp.ne.s32.totalorder %s64, %s66
    %p70 = scmp.eq.s32.totalorder %s9, 0
    %p71 = por %p69, %p70
    %p72 = scmp.ne.s32.totalorder %s64, %s66
    %p73 = scmp.eq.s32.totalorder %s14, 1
    %p74 = por %p72, %p73
    %p75 = scmp.ne.s32.totalorder %s66, %s67
    %p76 = scmp.eq.s32.totalorder %s14, 0
    %p77 = por %p75, %p76
    %p78 = scmp.ne.s32.totalorder %s66, %s67
    %p79 = scmp.eq.s32.totalorder %s15, 1
    %p80 = por %p78, %p79
    %p82 = scmp.ne.s32.totalorder %s67, %s81
    %p83 = scmp.eq.s32.totalorder %s15, 0
    %p84 = por %p82, %p83
    %s85 = ssub.s32 %s9, %s16
    %p86 = scmp.eq.s32.totalorder %s85, 0
    %s88 = sadd.s32 %s87, 1
    %s89 = scalar_select %p86, %s87, %s88
    %p92 = pneg %p86
    %p93 = scmp.eq.s32.totalorder %s9, 1
    %p94 = por %p92, %p93
    %p95 = scmp.ne.s32.totalorder %s87, %s90
    %p96 = scmp.eq.s32.totalorder %s9, 0
    %p97 = por %p95, %p96
    %p98 = scmp.ne.s32.totalorder %s87, %s90
    %p99 = scmp.eq.s32.totalorder %s14, 1
    %p100 = por %p98, %p99
    %p101 = scmp.ne.s32.totalorder %s90, %s91
    %p102 = scmp.eq.s32.totalorder %s14, 0
    %p103 = por %p101, %p102
    %p104 = scmp.ne.s32.totalorder %s90, %s91
    %p105 = scmp.eq.s32.totalorder %s15, 1
    %p106 = por %p104, %p105
    %p108 = scmp.ne.s32.totalorder %s91, %s107
    %p109 = scmp.eq.s32.totalorder %s15, 0
    %p110 = por %p108, %p109
    %p111 = scmp.le.s32.totalorder 1, %s9
    %p112 = scmp.lt.s32.totalorder %s9, 3
    %p113 = pnand %p111, %p112
    %p114 = pneg %p113
    // Predicated region
    $region9: #{inverted_residual_pallas.1} parent=5 // pred_check
      _
    $region10: #{inverted_residual_pallas.1} parent=5 // pred_check_branch
      %116 = sbr.rel (%p113) target = $region12
    $region11: #{inverted_residual_pallas.1} parent=5 // pred_region
      %s117 = ssub.s32 %s9, 1
      // Predicated region
      $region13: #{inverted_residual_pallas.1} parent=11 // pred_check
        %p118 = pneg %p56
      $region14: #{inverted_residual_pallas.1} parent=11 // pred_check_branch
        %120 = sbr.rel (%p118) target = $region16
      $region15: #{inverted_residual_pallas.1} parent=11 // pred_region
        _
      $region16: #{inverted_residual_pallas.1} parent=11 // pred_fallthru
        _
      // Predicated region
      $region17: #{inverted_residual_pallas.1} parent=11 // pred_check
        %p121 = pneg %p77
      $region18: #{inverted_residual_pallas.1} parent=11 // pred_check_branch
        %123 = sbr.rel (%p121) target = $region20
      $region19: #{inverted_residual_pallas.1} parent=11 // pred_region
        _
      $region20: #{inverted_residual_pallas.1} parent=11 // pred_fallthru
        _
    $region12: #{inverted_residual_pallas.1} parent=5 // pred_fallthru
      _
    %p124 = scmp.lt.s32.totalorder %s9, 2
    // Predicated region
    $region21: #{inverted_residual_pallas.1} parent=5 // pred_check
      %p125 = pneg %p124
    $region22: #{inverted_residual_pallas.1} parent=5 // pred_check_branch
      %127 = sbr.rel (%p125) target = $region24
    $region23: #{inverted_residual_pallas.1} parent=5 // pred_region
      // Predicated region
      $region25: #{inverted_residual_pallas.1} parent=23 // pred_check
        %p128 = pneg %p29
      $region26: #{inverted_residual_pallas.1} parent=23 // pred_check_branch
        %130 = sbr.rel (%p128) target = $region28
      $region27: #{inverted_residual_pallas.1} parent=23 // pred_region
        %p131 = scmp.lt.s32.totalorder %s9, 1
        %s132 = scalar_select %p131, %s9, 1
        %s133 = smul.addr %s132, 2
        %s134 = smul.addr %s133, 4
        %s135 = scalar_lea.vmem %s0, %s134
      $region28: #{inverted_residual_pallas.1} parent=23 // pred_fallthru
        _
    $region24: #{inverted_residual_pallas.1} parent=5 // pred_fallthru
      _
    %p136 = scmp.le.s32.totalorder 1, %s9
    %p137 = scmp.lt.s32.totalorder %s9, 3
    %p138 = pnand %p136, %p137
    %p139 = pneg %p138
    // Predicated region
    $region29: #{inverted_residual_pallas.1} parent=5 // pred_check
      _
    $region30: #{inverted_residual_pallas.1} parent=5 // pred_check_branch
      %141 = sbr.rel (%p138) target = $region32
    $region31: #{inverted_residual_pallas.1} parent=5 // pred_region
      %s142 = ssub.s32 %s9, 1
      %p143 = scmp.lt.s32.totalorder %s14, 1
      %s144 = scalar_select %p143, %s14, 1
      %s145 = smul.addr %s144, 2
      %s146 = smul.addr %s145, 4
      %s147 = scalar_lea.vmem %s0, %s146
      %p148 = pneg %p35
      %p149 = pneg %p32
      %p150 = pneg %p56
      %p151 = pneg %p53
      %p152 = pneg %p77
      %p153 = pneg %p74
      %p154 = pneg %p103
      %p155 = pneg %p100
      %p156 = scmp.lt.s32.totalorder %s14, 1
      %s157 = scalar_select %p156, %s14, 1
      %s158 = smul.addr %s157, 2
      %s159 = smul.addr %s158, 4
      %s160 = scalar_lea.vmem %s3, %s159
      %p161 = scmp.lt.s32.totalorder %s14, 1
      %s162 = scalar_select %p161, %s14, 1
      %s163 = smul.addr %s162, 2
      %s164 = smul.addr %s163, 4
      %s165 = scalar_lea.vmem %s0, %s164
      %p166 = scmp.lt.s32.totalorder %s14, 1
      %s167 = scalar_select %p166, %s14, 1
      %s168 = smul.addr %s167, 2
      %s169 = smul.addr %s168, 4
      %s170 = scalar_lea.vmem %s3, %s169
      %v171 = vld [vmem:[%s165] sm:$0xff]
      %v172 = vld [vmem:[%s1] sm:$0xf]
      %174 = vset.pattern.permute.xlu0 0
      %175 = vperm.xlu0 %174, %v172
      %v176 = vpop.permute.xlu0 %175
      %v179 = vlaneseq
      %v180 = vshrl.u32 %v179, 7
      %v181 = vsub.s32 2, %v180
      %v182 = vrot.slane %v171, %v181
      %v183 = vlaneseq
      %v184 = vshrl.u32 %v183, 7
      %v185 = vsub.s32 6, %v184
      %v186 = vrot.slane %v171, %v185
      %v189 = vlaneseq
      %v190 = vshrl.u32 %v189, 7
      %v191 = vsub.s32 2, %v190
      %v192 = vrot.slane %v182, %v191
      %v193 = vlaneseq
      %v194 = vshrl.u32 %v193, 7
      %v195 = vsub.s32 2, %v194
      %v196 = vrot.slane %v186, %v195
      %v197 = vmul.f32 %v176, %v192
      %v198 = vmul.f32 %v176, %v196
      %199 = vset.pattern.permute.xlu0 1
      %200 = vperm.xlu0 %199, %v172
      %v201 = vpop.permute.xlu0 %200
      %v203 = vlaneseq
      %v204 = vshrl.u32 %v203, 7
      %v205 = vsub.s32 3, %v204
      %v206 = vrot.slane %v171, %v205
      %v207 = vlaneseq
      %v208 = vshrl.u32 %v207, 7
      %v209 = vsub.s32 7, %v208
      %v210 = vrot.slane %v171, %v209
      %v213 = vlaneseq
      %v214 = vshrl.u32 %v213, 7
      %v215 = vsub.s32 3, %v214
      %v216 = vrot.slane %v206, %v215
      %v217 = vlaneseq
      %v218 = vshrl.u32 %v217, 7
      %v219 = vsub.s32 3, %v218
      %v220 = vrot.slane %v210, %v219
      %v221 = vmul.f32 %v201, %v216
      %v222 = vmul.f32 %v201, %v220
      %v223 = vadd.f32 %v197, %v221
      %v224 = vadd.f32 %v198, %v222
      %225 = vset.pattern.permute.xlu0 2
      %226 = vperm.xlu0 %225, %v172
      %v227 = vpop.permute.xlu0 %226
      %v229 = vadd.f32 %v223, %v227
      %v230 = vadd.f32 %v224, %v227
      %v231 = vmax.f32 %v229, 0.0
      %v232 = vmax.f32 %v230, 0.0
      %233 = vst [vmem:[#allocation2] sm:$0xff] 0.0
      %vm234 = vcmask 273408
      %235 = vst.msk [vmem:[#allocation2 + $0x8] sm:$0xf] %vm234, 0.0
      %v238 = vcombine.low %v231, %v232
      %239 = vrot.lane.b32.xlu0 %v238, 17
      %v240 = vpop.permute.xlu0 %239
      %v241 = vrot.slane %v240, 4
      %vm242 = vcmask 138240
      %v243 = vsel %vm242, %v241, %v240
      %vm246 = vcmask 1043592
      %vm247 = vcmask 1047556
      %vm248 = vmor %vm247, %vm246
      %249 = vst.msk [vmem:[#allocation2] sm:$0xff] %vm248, %v243
      %vm250 = vcmask 134144
      %251 = vst.msk [vmem:[#allocation2 + $0x8] sm:$0xf] %vm250, %v241
      %v252 = vlaneseq
      %v253 = vand.u32 %v252, 127
      %v254 = vadd.s32 %v253, 128
      %v255 = vand.u32 %v253, 15
      %v256 = vand.u32 %v254, 15
      %v257 = vld [vmem:[%s1] sm:$0xf]
      %v258 = vld [vmem:[#allocation2] sm:$0xff]
      %260 = vset.pattern.permute.xlu0 3
      %261 = vperm.xlu0 %260, %v257
      %v262 = vpop.permute.xlu0 %261
      %v265 = vcombine.high %v258, %v258
      %v267 = vmul.f32 %v262, %v258
      %v268 = vmul.f32 %v262, %v265
      %v269 = vld [vmem:[#allocation2] sm:$0xff]
      %v270 = vld [vmem:[#allocation2 + $0x8] sm:$0xf]
      %v271 = vld [vmem:[%s1] sm:$0xf]
      %273 = vset.pattern.permute.xlu0 6
      %274 = vperm.xlu0 %273, %v271
      %v275 = vpop.permute.xlu0 %274
      %v279 = vcombine.high %v269, %v269
      %280 = vrot.lane.b32.xlu0 %v269, 112
      %v281 = vpop.permute.xlu0 %280
      %282 = vrot.lane.b32.xlu0 %v279, 112
      %v283 = vpop.permute.xlu0 %282
      %284 = vrot.lane.b32.xlu0 %v270, 112
      %v285 = vpop.permute.xlu0 %284
      %vm286 = vcmask 916480
      %v287 = vsel %vm286, %v281, %v283
      %v288 = vsel %vm286, %v283, %v285
      %v291 = vmul.f32 %v275, %v287
      %v292 = vmul.f32 %v275, %v288
      %v293 = vadd.f32 %v267, %v291
      %v294 = vadd.f32 %v268, %v292
      %v295 = vld [vmem:[#allocation2] sm:$0xff]
      %v296 = vld [vmem:[#allocation2 + $0x8] sm:$0xf]
      %v297 = vld [vmem:[%s1] sm:$0xf]
      %299 = vset.pattern.permute.xlu0 9
      %300 = vperm.xlu0 %299, %v297
      %v301 = vpop.permute.xlu0 %300
      %v305 = vcombine.high %v295, %v295
      %306 = vrot.lane.b32.xlu0 %v295, 96
      %v307 = vpop.permute.xlu0 %306
      %308 = vrot.lane.b32.xlu0 %v305, 96
      %v309 = vpop.permute.xlu0 %308
      %310 = vrot.lane.b32.xlu0 %v296, 96
      %v311 = vpop.permute.xlu0 %310
      %vm312 = vcmask 785408
      %v313 = vsel %vm312, %v307, %v309
      %v314 = vsel %vm312, %v309, %v311
      %v317 = vmul.f32 %v301, %v313
      %v318 = vmul.f32 %v301, %v314
      %v319 = vadd.f32 %v293, %v317
      %v320 = vadd.f32 %v294, %v318
      %vm321 = vcmp.gt.s32.totalorder %v255, 0
      %vm322 = vcmp.gt.s32.totalorder %v256, 0
      %v323 = vsel %vm321, 1, 0
      %v324 = vsel %vm322, 1, 0
      %vm325 = vcmp.eq.s32.totalorder %v323, 1
      %vm326 = vcmp.eq.s32.totalorder %v324, 1
      %v327 = vsel %vm325, %v319, 0.0
      %v328 = vsel %vm326, %v320, 0.0
      %329 = vset.pattern.permute.xlu0 12
      %330 = vperm.xlu0 %329, %v257
      %v331 = vpop.permute.xlu0 %330
      %v333 = vadd.f32 %v331, %v327
      %v334 = vadd.f32 %v331, %v328
      %v335 = vld [vmem:[#allocation2] sm:$0xff]
      %v336 = vld [vmem:[#allocation2 + $0x8] sm:$0xf]
      %v337 = vld [vmem:[%s1] sm:$0xf]
      %339 = vset.pattern.permute.xlu0 4
      %340 = vperm.xlu0 %339, %v337
      %v341 = vpop.permute.xlu0 %340
      %v345 = vcombine.high %v335, %v335
      %346 = vrot.lane.b32.xlu0 %v335, 127
      %v347 = vpop.permute.xlu0 %346
      %348 = vrot.lane.b32.xlu0 %v345, 127
      %v349 = vpop.permute.xlu0 %348
      %350 = vrot.lane.b32.xlu0 %v336, 127
      %v351 = vpop.permute.xlu0 %350
      %vm352 = vcmask 1039360
      %v353 = vsel %vm352, %v347, %v349
      %v354 = vsel %vm352, %v349, %v351
      %v357 = vmul.f32 %v341, %v353
      %v358 = vmul.f32 %v341, %v354
      %v359 = vld [vmem:[%s1] sm:$0xf]
      %361 = vset.pattern.permute.xlu0 7
      %362 = vperm.xlu0 %361, %v359
      %v363 = vpop.permute.xlu0 %362
      %v365 = vmul.f32 %v363, %v231
      %v366 = vmul.f32 %v363, %v232
      %v367 = vadd.f32 %v357, %v365
      %v368 = vadd.f32 %v358, %v366
      %v369 = vld [vmem:[#allocation2] sm:$0xff]
      %v370 = vld [vmem:[#allocation2 + $0x8] sm:$0xf]
      %371 = vset.pattern.permute.xlu0 10
      %372 = vperm.xlu0 %371, %v359
      %v373 = vpop.permute.xlu0 %372
      %v377 = vcombine.high %v369, %v369
      %378 = vrot.lane.b32.xlu0 %v369, 95
      %v379 = vpop.permute.xlu0 %378
      %380 = vrot.lane.b32.xlu0 %v377, 95
      %v381 = vpop.permute.xlu0 %380
      %382 = vrot.lane.b32.xlu0 %v370, 95
      %v383 = vpop.permute.xlu0 %382
      %vm384 = vcmask 777216
      %v385 = vsel %vm384, %v379, %v381
      %v386 = vsel %vm384, %v381, %v383
      %v389 = vmul.f32 %v373, %v385
      %v390 = vmul.f32 %v373, %v386
      %v391 = vadd.f32 %v367, %v389
      %v392 = vadd.f32 %v368, %v390
      %v393 = vadd.f32 %v333, %v391
      %v394 = vadd.f32 %v334, %v392
      %v395 = vld [vmem:[#allocation2] sm:$0xff]
      %v396 = vld [vmem:[#allocation2 + $0x8] sm:$0xf]
      %v397 = vld [vmem:[%s1] sm:$0xf]
      %399 = vset.pattern.permute.xlu0 5
      %400 = vperm.xlu0 %399, %v397
      %v401 = vpop.permute.xlu0 %400
      %v405 = vcombine.high %v395, %v395
      %406 = vrot.lane.b32.xlu0 %v395, 126
      %v407 = vpop.permute.xlu0 %406
      %408 = vrot.lane.b32.xlu0 %v405, 126
      %v409 = vpop.permute.xlu0 %408
      %410 = vrot.lane.b32.xlu0 %v396, 126
      %v411 = vpop.permute.xlu0 %410
      %vm412 = vcmask 1031168
      %v413 = vsel %vm412, %v407, %v409
      %v414 = vsel %vm412, %v409, %v411
      %v417 = vmul.f32 %v401, %v413
      %v418 = vmul.f32 %v401, %v414
      %v419 = vld [vmem:[#allocation2] sm:$0xff]
      %v420 = vld [vmem:[#allocation2 + $0x8] sm:$0xf]
      %v421 = vld [vmem:[%s1] sm:$0xf]
      %423 = vset.pattern.permute.xlu0 8
      %424 = vperm.xlu0 %423, %v421
      %v425 = vpop.permute.xlu0 %424
      %v429 = vcombine.high %v419, %v419
      %430 = vrot.lane.b32.xlu0 %v419, 110
      %v431 = vpop.permute.xlu0 %430
      %432 = vrot.lane.b32.xlu0 %v429, 110
      %v433 = vpop.permute.xlu0 %432
      %434 = vrot.lane.b32.xlu0 %v420, 110
      %v435 = vpop.permute.xlu0 %434
      %vm436 = vcmask 900096
      %v437 = vsel %vm436, %v431, %v433
      %v438 = vsel %vm436, %v433, %v435
      %v441 = vmul.f32 %v425, %v437
      %v442 = vmul.f32 %v425, %v438
      %v443 = vadd.f32 %v417, %v441
      %v444 = vadd.f32 %v418, %v442
      %v445 = vld [vmem:[#allocation2] sm:$0xff]
      %v446 = vld [vmem:[#allocation2 + $0x8] sm:$0xf]
      %v447 = vld [vmem:[%s1] sm:$0xf]
      %449 = vset.pattern.permute.xlu0 11
      %450 = vperm.xlu0 %449, %v447
      %v451 = vpop.permute.xlu0 %450
      %v455 = vcombine.high %v445, %v445
      %456 = vrot.lane.b32.xlu0 %v445, 94
      %v457 = vpop.permute.xlu0 %456
      %458 = vrot.lane.b32.xlu0 %v455, 94
      %v459 = vpop.permute.xlu0 %458
      %460 = vrot.lane.b32.xlu0 %v446, 94
      %v461 = vpop.permute.xlu0 %460
      %vm462 = vcmask 769024
      %v463 = vsel %vm462, %v457, %v459
      %v464 = vsel %vm462, %v459, %v461
      %v467 = vmul.f32 %v451, %v463
      %v468 = vmul.f32 %v451, %v464
      %v469 = vadd.f32 %v443, %v467
      %v470 = vadd.f32 %v444, %v468
      %vm471 = vcmp.lt.s32.totalorder %v255, 15
      %vm472 = vcmp.lt.s32.totalorder %v256, 15
      %v473 = vsel %vm471, 1, 0
      %v474 = vsel %vm472, 1, 0
      %vm475 = vcmp.eq.s32.totalorder %v473, 1
      %vm476 = vcmp.eq.s32.totalorder %v474, 1
      %v477 = vsel %vm475, %v469, 0.0
      %v478 = vsel %vm476, %v470, 0.0
      %v479 = vadd.f32 %v393, %v477
      %v480 = vadd.f32 %v394, %v478
      %v481 = vmax.f32 %v479, 0.0
      %v482 = vmax.f32 %v480, 0.0
      %v483 = vld [vmem:[%s2] sm:$0x3]
      %485 = vset.pattern.permute.xlu0 0
      %486 = vperm.xlu0 %485, %v483
      %v487 = vpop.permute.xlu0 %486
      %v489 = vlaneseq
      %v490 = vshrl.u32 %v489, 7
      %v491 = vsub.s32 0, %v490
      %v492 = vrot.slane %v481, %v491
      %v493 = vlaneseq
      %v494 = vshrl.u32 %v493, 7
      %v495 = vsub.s32 0, %v494
      %v496 = vrot.slane %v482, %v495
      %v497 = vmul.f32 %v487, %v492
      %v498 = vmul.f32 %v487, %v496
      %499 = vset.pattern.permute.xlu0 1
      %500 = vperm.xlu0 %499, %v483
      %v501 = vpop.permute.xlu0 %500
      %v503 = vlaneseq
      %v504 = vshrl.u32 %v503, 7
      %v505 = vsub.s32 1, %v504
      %v506 = vrot.slane %v481, %v505
      %v507 = vlaneseq
      %v508 = vshrl.u32 %v507, 7
      %v509 = vsub.s32 1, %v508
      %v510 = vrot.slane %v482, %v509
      %v511 = vmul.f32 %v501, %v506
      %v512 = vmul.f32 %v501, %v510
      %v513 = vadd.f32 %v497, %v511
      %v514 = vadd.f32 %v498, %v512
      %515 = vset.pattern.permute.xlu0 2
      %516 = vperm.xlu0 %515, %v483
      %v517 = vpop.permute.xlu0 %516
      %v519 = vlaneseq
      %v520 = vshrl.u32 %v519, 7
      %v521 = vsub.s32 2, %v520
      %v522 = vrot.slane %v481, %v521
      %v523 = vlaneseq
      %v524 = vshrl.u32 %v523, 7
      %v525 = vsub.s32 2, %v524
      %v526 = vrot.slane %v482, %v525
      %v527 = vmul.f32 %v517, %v522
      %v528 = vmul.f32 %v517, %v526
      %v529 = vadd.f32 %v513, %v527
      %v530 = vadd.f32 %v514, %v528
      %531 = vset.pattern.permute.xlu0 3
      %532 = vperm.xlu0 %531, %v483
      %v533 = vpop.permute.xlu0 %532
      %v535 = vlaneseq
      %v536 = vshrl.u32 %v535, 7
      %v537 = vsub.s32 3, %v536
      %v538 = vrot.slane %v481, %v537
      %v539 = vlaneseq
      %v540 = vshrl.u32 %v539, 7
      %v541 = vsub.s32 3, %v540
      %v542 = vrot.slane %v482, %v541
      %v543 = vmul.f32 %v533, %v538
      %v544 = vmul.f32 %v533, %v542
      %v545 = vadd.f32 %v529, %v543
      %v546 = vadd.f32 %v530, %v544
      %547 = vset.pattern.permute.xlu0 4
      %548 = vperm.xlu0 %547, %v483
      %v549 = vpop.permute.xlu0 %548
      %v551 = vadd.f32 %v545, %v549
      %v552 = vadd.f32 %v546, %v549
      %v553 = vcombine.high %v171, %v171
      %v554 = vrot.slane %v171, 2
      %v555 = vrot.slane %v553, 2
      %v558 = vadd.f32 %v551, %v554
      %v559 = vadd.f32 %v552, %v555
      %v560 = vlaneseq
      %v561 = vshrl.u32 %v560, 7
      %v562 = vsub.s32 0, %v561
      %v563 = vrot.slane %v171, %v562
      %v564 = vlaneseq
      %v565 = vshrl.u32 %v564, 7
      %v566 = vsub.s32 4, %v565
      %v567 = vrot.slane %v171, %v566
      %v572 = vrot.slane %v558, 7
      %v573 = vrot.slane %v559, 7
      %v576 = vlaneseq
      %v577 = vshrl.u32 %v576, 7
      %v578 = vsub.s32 1, %v577
      %v579 = vrot.slane %v171, %v578
      %v580 = vlaneseq
      %v581 = vshrl.u32 %v580, 7
      %v582 = vsub.s32 5, %v581
      %v583 = vrot.slane %v171, %v582
      %v586 = vrot.slane %v558, 6
      %v587 = vrot.slane %v559, 6
      %vm590 = vcmask 1040384
      %v591 = vsel %vm590, %v563, %v572
      %v592 = vsel %vm590, %v567, %v573
      %vm593 = vcmask 1041408
      %v594 = vsel %vm593, %v591, %v579
      %v595 = vsel %vm593, %v592, %v583
      %vm596 = vcmask 1042432
      %v597 = vsel %vm596, %v594, %v586
      %v598 = vsel %vm596, %v595, %v587
      %v601 = vcombine.low %v597, %v598
      %603 = vst [vmem:[%s170] sm:$0xff] %v601
      %p604 = scmp.lt.s32.totalorder %s14, 1
      %s605 = scalar_select %p604, %s14, 1
      %s606 = smul.addr %s605, 2
      %s607 = smul.addr %s606, 4
      %s608 = scalar_lea.vmem %s3, %s607
      // Predicated region
      $region33: #{inverted_residual_pallas.1} parent=31 // pred_check
        %p609 = pneg %p100
      $region34: #{inverted_residual_pallas.1} parent=31 // pred_check_branch
        %611 = sbr.rel (%p609) target = $region36
      $region35: #{inverted_residual_pallas.1} parent=31 // pred_region
        _
      $region36: #{inverted_residual_pallas.1} parent=31 // pred_fallthru
        _
    $region32: #{inverted_residual_pallas.1} parent=5 // pred_fallthru
      _
    %p612 = scmp.le.s32.totalorder 2, %s9
    // Predicated region
    $region37: #{inverted_residual_pallas.1} parent=5 // pred_check
      %p613 = pneg %p612
    $region38: #{inverted_residual_pallas.1} parent=5 // pred_check_branch
      %615 = sbr.rel (%p613) target = $region40
    $region39: #{inverted_residual_pallas.1} parent=5 // pred_region
      %s616 = ssub.s32 %s9, 2
      // Predicated region
      $region41: #{inverted_residual_pallas.1} parent=39 // pred_check
        %p617 = pneg %p106
      $region42: #{inverted_residual_pallas.1} parent=39 // pred_check_branch
        %619 = sbr.rel (%p617) target = $region44
      $region43: #{inverted_residual_pallas.1} parent=39 // pred_region
        %p620 = scmp.lt.s32.totalorder %s15, 1
        %s621 = scalar_select %p620, %s15, 1
        %s622 = smul.addr %s621, 2
        %s623 = smul.addr %s622, 4
        %s624 = scalar_lea.vmem %s3, %s623
      $region44: #{inverted_residual_pallas.1} parent=39 // pred_fallthru
        _
    $region40: #{inverted_residual_pallas.1} parent=5 // pred_fallthru
      _
  $region6: #{inverted_residual_pallas.1} parent=0 // loop_footer
    %s13 = sadd.s32 1, %s9
  $region7: #{inverted_residual_pallas.1} parent=0 // loop_footer_branch
    %8 = sbr.rel target = $region3
  $region8: #{inverted_residual_pallas.1} parent=0 // loop_exit
    _

</llo_original>
